<compile_context>
chip_gen: v5e
topology: v5e:2x2
jax: 0.10.0
libtpu: 0.0.40
codegen_flags: <defaults>
</compile_context>

<pallas_src>
import jax
import jax.numpy as jnp
from jax import lax
from jax.experimental import pallas as pl
from jax.experimental.pallas import tpu as pltpu

NEG = -1.0e30            # finite "minus infinity": keeps f32 arithmetic NaN-free
INF_CLAMP = -0.5 * NEG   # zero_infinity threshold, derived from NEG

CTC_BATCH_BLOCK = 8      # samples per grid step == sublanes of one vreg
VMEM_LIMIT = 48 * 1024 * 1024   # explicit scoped-VMEM budget (fits v5e/v6e/v7x)


# --------------------------------------------------------------------------
# CTC loss kernel.
# grid = (nblk, n_tblk): batch blocks ("parallel") x time chunks ("arbitrary").
# alpha is carried across time chunks in VMEM scratch; emissions are rebuilt
# per chunk so only a (T_tile, B, C) logits slab is ever live.
# --------------------------------------------------------------------------
def _ctc_kernel(tmax_ref,      # SMEM (nblk,) int32 block-max input length (prefetch)
                logits_ref,    # (T_tile, B, C) f32  encoder outputs, time-major chunk
                ext_ref,       # (B, S_pad)     int32 blank-interleaved targets
                in_len_ref,    # (B, 1)         int32
                tgt_len_ref,   # (B, 1)         int32
                loss_ref,      # (1, B, 128)    f32  per-sample loss / target_len
                em_ref,        # (T_tile, B, S_pad) f32 scratch: chunk emission log-probs
                alpha_ref):    # (B, S_pad)     f32 scratch: alpha carried across chunks
    nb = pl.program_id(0)
    tb = pl.program_id(1)
    T_tile, B, C = logits_ref.shape
    S_pad = ext_ref.shape[1]

    ext = ext_ref[...]                                    # (B, S_pad)
    T_n = in_len_ref[...]                                 # (B, 1)
    L_n = tgt_len_ref[...]                                # (B, 1)
    S_n = 2 * L_n + 1                                     # (B, 1)
    lane = lax.broadcasted_iota(jnp.int32, (B, S_pad), 1)

    # skip-connection (s-2 -> s): label slot, not blank, differs from label two
    # slots back (assumes targets never contain blank id 0).
    ext_m2 = pltpu.roll(ext, shift=2, axis=1)
    allow2 = (lane >= 2) & (ext != 0) & (ext != ext_m2)

    # Fused log_softmax over the class dim for this time chunk only.
    x = logits_ref[...]                                   # (T_tile, B, C)
    mx = jnp.max(x, axis=-1, keepdims=True)
    z = x - mx
    logp = z - jnp.log(jnp.sum(jnp.exp(z), axis=-1, keepdims=True))

    # emission[t, b, s] = logp[t, b, ext[b, s]] via per-sample one-hot matmuls,
    # stored directly into the chunk scratch (no full-tensor where-merge).
    c_iota = lax.broadcasted_iota(jnp.int32, (C, S_pad), 0)
    for b in range(B):
        onehot_b = (c_iota == ext[b:b + 1, :]).astype(jnp.float32)       # (C, S_pad)
        em_ref[:, b, :] = jnp.dot(logp[:, b, :], onehot_b,
                                  preferred_element_type=jnp.float32)    # (T_tile, S_pad)

    t0 = tb * T_tile

    # alpha at global t = 0: only s = 0 (blank) and s = 1 (first label, if any).
    @pl.when(tb == 0)
    def _():
        e0 = em_ref[0]                                    # (B, S_pad)
        alpha_ref[...] = jnp.where(lane < jnp.minimum(S_n, 2), e0, NEG)

    # serial recursion over this chunk's time steps; trip count bounded by the
    # block's max input length (padded time steps are skipped entirely).
    t_max = tmax_ref[nb]
    lo = jnp.where(tb == 0, 1, 0).astype(jnp.int32)
    hi = jnp.clip(t_max - t0, 0, T_tile).astype(jnp.int32)

    def body(tl, alpha):                                  # alpha: (B, S_pad)
        a1 = jnp.where(lane >= 1, pltpu.roll(alpha, shift=1, axis=1), NEG)
        a2 = jnp.where(allow2, pltpu.roll(alpha, shift=2, axis=1), NEG)
        m3 = jnp.maximum(jnp.maximum(alpha, a1), a2)
        lse3 = m3 + jnp.log(jnp.exp(alpha - m3) + jnp.exp(a1 - m3)
                            + jnp.exp(a2 - m3))
        et = em_ref[tl]                                   # (B, S_pad)
        new_alpha = jnp.where(lane < S_n, lse3 + et, NEG)
        # freeze rows whose input_length has been reached
        return jnp.where(t0 + tl < T_n, new_alpha, alpha)

    alpha_ref[...] = lax.fori_loop(lo, hi, body, alpha_ref[...])

    # final log-likelihood after the last time chunk.
    @pl.when(tb == pl.num_programs(1) - 1)
    def _():
        alpha = alpha_ref[...]
        fmask = (lane == (S_n - 1)) | ((lane == (S_n - 2)) & (S_n >= 2))
        af = jnp.where(fmask, alpha, NEG)
        mf = jnp.max(af, axis=1, keepdims=True)           # (B, 1)
        loss = -(mf + jnp.log(jnp.sum(jnp.exp(af - mf), axis=1, keepdims=True)))
        loss = jnp.where(loss > INF_CLAMP, 0.0, loss)     # zero_infinity
        loss = loss / jnp.maximum(L_n, 1).astype(jnp.float32)  # 'mean' per-sample div
        loss_ref[...] = jnp.broadcast_to(loss.reshape(1, B, 1), loss_ref.shape)


def ctc_loss_mean(encoder_outputs_tnc, targets, input_lengths, target_lengths):
    # encoder_outputs_tnc: (T, N, C) float32, PyTorch CTC layout kept as-is.
    T, N, C = encoder_outputs_tnc.shape
    B = min(N, CTC_BATCH_BLOCK)
    nblk = pl.cdiv(N, B)
    N_pad = nblk * B

    logits = encoder_outputs_tnc
    if N_pad != N:
        # TODO(synk): for large N not a multiple of 8, overlap the last batch
        # block via element-offset index maps instead of this extra HBM pad pass.
        logits = jnp.pad(logits, ((0, 0), (0, N_pad - N), (0, 0)))

    tgt = jnp.pad(targets.astype(jnp.int32), ((0, N_pad - N), (0, 0)))
    in_len = jnp.pad(input_lengths.astype(jnp.int32), (0, N_pad - N))
    tgt_len = jnp.pad(target_lengths.astype(jnp.int32), (0, N_pad - N))

    # blank-interleaved extended targets as int32 (one-hot is built in-kernel).
    Lmax = targets.shape[1]
    S = 2 * Lmax + 1
    S_pad = max(128, ((S + 127) // 128) * 128)
    s_idx = jnp.arange(S_pad)
    is_label = (s_idx % 2 == 1) & (s_idx < S)
    tok_idx = jnp.clip((s_idx - 1) // 2, 0, Lmax - 1)
    ext = jnp.where(is_label[None, :], tgt[:, tok_idx], 0).astype(jnp.int32)

    # Time-chunk size from a ~8 MiB logits-slab budget (Pallas double-buffers it).
    T_tile = max(1, min(T, (8 * 1024 * 1024) // (B * C * 4)))
    n_tblk = pl.cdiv(T, T_tile)

    # per-block serial trip count bound (skips padded time steps).
    tmax_blk = jnp.clip(jnp.max(in_len.reshape(nblk, B), axis=1), 1, T).astype(jnp.int32)

    grid_spec = pltpu.PrefetchScalarGridSpec(
        num_scalar_prefetch=1,
        grid=(nblk, n_tblk),
        in_specs=[
            pl.BlockSpec((T_tile, B, C), lambda nb, tb, tm: (tb, nb, 0)),
            pl.BlockSpec((B, S_pad), lambda nb, tb, tm: (nb, 0)),
            pl.BlockSpec((B, 1), lambda nb, tb, tm: (nb, 0)),
            pl.BlockSpec((B, 1), lambda nb, tb, tm: (nb, 0)),
        ],
        out_specs=pl.BlockSpec((1, B, 128), lambda nb, tb, tm: (nb, 0, 0)),
        scratch_shapes=[pltpu.VMEM((T_tile, B, S_pad), jnp.float32),
                        pltpu.VMEM((B, S_pad), jnp.float32)],
    )
    per = pl.pallas_call(
        _ctc_kernel,
        out_shape=jax.ShapeDtypeStruct((nblk, B, 128), jnp.float32),
        grid_spec=grid_spec,
        compiler_params=pltpu.CompilerParams(
            dimension_semantics=("parallel", "arbitrary"),
            vmem_limit_bytes=VMEM_LIMIT),
    )(tmax_blk, logits, ext, in_len.reshape(N_pad, 1), tgt_len.reshape(N_pad, 1))
    per_sample = per[:, :, 0].reshape(N_pad)[:N]          # drop batch padding
    return jnp.mean(per_sample)


# --------------------------------------------------------------------------
# Proxy LLM loss kernel.
# grid = (layers K, row tiles M, vocab tiles V); V innermost ("arbitrary") with
# an online logsumexp + running target-logit so only an (H, V_tile) weight slab
# and an (M_tile, V_tile) logits tile are ever live.
# --------------------------------------------------------------------------
def _make_lm_kernel(v_real):
    def kernel(emb_ref,   # (1, M_tile, H) bf16  resident across v
               w_ref,     # (H, V_tile)    bf16  streamed over v
               lab_ref,   # (M_tile, 1)    int32; -1 = ignore
               out_ref,   # (1, 1, 2, 128) f32   [ce_sum ; token_count]
               m_ref,     # (M_tile, 1)    f32 scratch: running max
               l_ref,     # (M_tile, 1)    f32 scratch: running sum-exp
               tgt_ref):  # (M_tile, 1)    f32 scratch: running target logit
        v = pl.program_id(2)
        n_v = pl.num_programs(2)
        M_tile = emb_ref.shape[1]
        V_tile = w_ref.shape[1]

        @pl.when(v == 0)
        def _():
            m_ref[...] = jnp.full_like(m_ref, NEG)
            l_ref[...] = jnp.zeros_like(l_ref)
            tgt_ref[...] = jnp.zeros_like(tgt_ref)

        # MXU matmul for this (M_tile, V_tile) logits tile (bf16 in, f32 acc).
        x = emb_ref[0]                                         # (M_tile, H) bf16
        logits = jnp.dot(x, w_ref[...], preferred_element_type=jnp.float32)

        # tile-local column indices; mask vocab padding columns.
        col = v * V_tile + lax.broadcasted_iota(jnp.int32, (M_tile, V_tile), 1)
        logits = jnp.where(col < v_real, logits, NEG)

        labels = lab_ref[...]                                  # (M_tile, 1)
        m_old = m_ref[...]
        m_new = jnp.maximum(m_old, jnp.max(logits, axis=-1, keepdims=True))
        p = jnp.exp(logits - m_new)
        l_ref[...] = l_ref[...] * jnp.exp(m_old - m_new) + jnp.sum(p, axis=-1,
                                                                   keepdims=True)
        m_ref[...] = m_new
        # target logit: the label falls in exactly one vocab tile.
        tgt_ref[...] = tgt_ref[...] + jnp.sum(
            jnp.where(col == labels, logits, 0.0), axis=-1, keepdims=True)

        @pl.when(v == n_v - 1)
        def _():
            valid = (labels >= 0).astype(jnp.float32)          # (M_tile, 1)
            lse = m_ref[...] + jnp.log(l_ref[...])
            ce_sum = jnp.sum(valid * (lse - tgt_ref[...]))
            cnt = jnp.sum(valid)
            row = lax.broadcasted_iota(jnp.int32, out_ref.shape, 2)
            out_ref[...] = jnp.where(row == 0, ce_sum, cnt)
    return kernel


def lm_proxy_loss(intermediate_outputs, lm_head_w, labels):
    # intermediate_outputs: (K, N, Lseq, H); lm_head_w: (H, V); labels: (N, Lseq)
    K, N, Lseq, H = intermediate_outputs.shape
    V = lm_head_w.shape[1]
    M = N * Lseq

    # causal LM shift: position p predicts labels[p+1]; last position ignored.
    shifted = jnp.concatenate(
        [labels[:, 1:], jnp.full((N, 1), -1, labels.dtype)], axis=1)
    lab_flat = shifted.reshape(M).astype(jnp.int32)

    M_TILE = min(M, 256)
    V_TILE = min(V, 512)
    M_pad = pl.cdiv(M, M_TILE) * M_TILE
    V_pad = pl.cdiv(V, V_TILE) * V_TILE

    # bf16 at the boundary: halves activation + weight HBM traffic (f32 accum in dot).
    emb = intermediate_outputs.reshape(K, M, H).astype(jnp.bfloat16)
    if M_pad != M:
        emb = jnp.pad(emb, ((0, 0), (0, M_pad - M), (0, 0)))
        lab_flat = jnp.pad(lab_flat, (0, M_pad - M), constant_values=-1)
    w = lm_head_w.astype(jnp.bfloat16)
    if V_pad != V:
        w = jnp.pad(w, ((0, 0), (0, V_pad - V)))   # padded cols masked in-kernel
    lab2 = lab_flat.reshape(M_pad, 1)

    n_m = M_pad // M_TILE
    n_v = V_pad // V_TILE

    # TODO(synk): on v7x consider pipeline_mode=pl.Buffered(3) on the weight slab
    # to hide its DMA behind the matmul once slab sizes are tuned for 64 MiB VMEM.
    grid_spec = pltpu.PrefetchScalarGridSpec(
        num_scalar_prefetch=0,
        grid=(K, n_m, n_v),
        in_specs=[
            pl.BlockSpec((1, M_TILE, H), lambda k, m, v: (k, m, 0)),   # resident in v
            pl.BlockSpec((H, V_TILE), lambda k, m, v: (0, v)),         # streamed over v
            pl.BlockSpec((M_TILE, 1), lambda k, m, v: (m, 0)),
        ],
        out_specs=pl.BlockSpec((1, 1, 2, 128), lambda k, m, v: (k, m, 0, 0)),
        scratch_shapes=[pltpu.VMEM((M_TILE, 1), jnp.float32),
                        pltpu.VMEM((M_TILE, 1), jnp.float32),
                        pltpu.VMEM((M_TILE, 1), jnp.float32)],
    )
    out = pl.pallas_call(
        _make_lm_kernel(V),
        out_shape=jax.ShapeDtypeStruct((K, n_m, 2, 128), jnp.float32),
        grid_spec=grid_spec,
        compiler_params=pltpu.CompilerParams(
            dimension_semantics=("parallel", "parallel", "arbitrary"),
            vmem_limit_bytes=VMEM_LIMIT),
    )(emb, w, lab2)

    ce_k = jnp.sum(out[:, :, 0, 0], axis=1)                # (K,)
    cnt_k = jnp.sum(out[:, :, 1, 0], axis=1)               # (K,)
    per_layer = ce_k / jnp.maximum(cnt_k, 1.0)             # token-weighted CE per layer
    return jnp.mean(per_layer)


# --------------------------------------------------------------------------
def combined_ctc_lm_loss(encoder_outputs, intermediate_outputs, input_lengths,
                         targets, target_lengths, labels, lm_head_w,
                         lambda_llm=0.5):
    ctc = ctc_loss_mean(encoder_outputs, targets, input_lengths, target_lengths)
    # TODO(synk): tokenizer.encode and the full LLaMA forward (attention/MLP
    # stack) have no clean in-kernel equivalent; only the lm_head projection +
    # causal token cross-entropy hot path of the LLM loss is in Pallas.
    llm = lm_proxy_loss(intermediate_outputs, lm_head_w, labels)
    return ctc + lambda_llm * llm


if __name__ == "__main__":
    key = jax.random.PRNGKey(0)
    T, N, C = 16, 2, 32            # CTC: time, batch, vocab (blank = 0)
    K, Lseq, H, V = 2, 8, 32, 128  # LLM proxy: layers, seq, hidden, vocab
    lambda_llm = 0.5

    k1, k2, k3, k4, k5 = jax.random.split(key, 5)
    encoder_outputs = jax.random.normal(k1, (T, N, C), jnp.float32)        # (T, N, C)
    intermediate_outputs = jax.random.normal(k2, (K, N, Lseq, H), jnp.float32)
    input_lengths = jnp.array([16, 12], jnp.int32)
    target_lengths = jnp.array([5, 3], jnp.int32)
    Lmax = 6
    targets = jax.random.randint(k3, (N, Lmax), 1, C)                      # no blanks
    targets = jnp.where(jnp.arange(Lmax)[None, :] < target_lengths[:, None],
                        targets, 0)
    labels = jax.random.randint(k4, (N, Lseq), 0, V)   # "tokenized" target_texts
    lm_head_w = 0.05 * jax.random.normal(k5, (H, V), jnp.float32)  # synthetic lm head

    total = combined_ctc_lm_loss(encoder_outputs, intermediate_outputs,
                                 input_lengths, targets, target_lengths,
                                 labels, lm_head_w, lambda_llm)
    jax.block_until_ready(total)
    print("KERNEL_OK")
</pallas_src>

<mosaic_0001>
module attributes {stable_mosaic.version = 11 : i64} {
  func.func @_ctc_kernel(%arg0: i32, %arg1: i32, %arg2: memref<1xi32, #tpu.memory_space<smem>>, %arg3: memref<16x2x32xf32, #tpu.memory_space<vmem>>, %arg4: memref<2x128xi32, #tpu.memory_space<vmem>>, %arg5: memref<2x1xi32, #tpu.memory_space<vmem>>, %arg6: memref<2x1xi32, #tpu.memory_space<vmem>>, %arg7: memref<1x2x128xf32, #tpu.memory_space<vmem>>, %arg8: memref<16x2x128xf32, #tpu.memory_space<vmem>>, %arg9: memref<2x128xf32, #tpu.memory_space<vmem>>) attributes {dimension_semantics = [#tpu.dimension_semantics<parallel>, #tpu.dimension_semantics<arbitrary>], iteration_bounds = array<i64: 1, 1>, scalar_prefetch = 1 : i64, scratch_operands = 2 : i64, tpu.core_type = #tpu.core_type<tc>, window_params = [{transform_indices = @transform_0, window_bounds = array<i64: 16, 2, 32>}, {transform_indices = @transform_1, window_bounds = array<i64: 2, 128>}, {transform_indices = @transform_2, window_bounds = array<i64: 2, 1>}, {transform_indices = @transform_3, window_bounds = array<i64: 2, 1>}, {transform_indices = @transform_4, window_bounds = array<i64: 1, 2, 128>}]} {
    %c0 = arith.constant 0 : index
    %c0_0 = arith.constant 0 : index
    %0 = vector.load %arg4[%c0, %c0_0] : memref<2x128xi32, #tpu.memory_space<vmem>>, vector<2x128xi32>
    %c0_1 = arith.constant 0 : index
    %c0_2 = arith.constant 0 : index
    %1 = vector.load %arg5[%c0_1, %c0_2] : memref<2x1xi32, #tpu.memory_space<vmem>>, vector<2x1xi32>
    %c0_3 = arith.constant 0 : index
    %c0_4 = arith.constant 0 : index
    %2 = vector.load %arg6[%c0_3, %c0_4] : memref<2x1xi32, #tpu.memory_space<vmem>>, vector<2x1xi32>
    %c2_i32 = arith.constant 2 : i32
    %3 = vector.broadcast %c2_i32 : i32 to vector<2x1xi32>
    %4 = arith.muli %3, %2 : vector<2x1xi32>
    %c1_i32 = arith.constant 1 : i32
    %5 = vector.broadcast %c1_i32 : i32 to vector<2x1xi32>
    %6 = arith.addi %4, %5 : vector<2x1xi32>
    %7 = tpu.iota {dimensions = array<i32: 1>} : vector<2x128xi32>
    %c2_i32_5 = arith.constant 2 : i32
    %8 = tpu.dynamic_rotate %0 by %c2_i32_5 dim 1 : vector<2x128xi32>, i32 -> vector<2x128xi32>
    %c2_i32_6 = arith.constant 2 : i32
    %9 = vector.broadcast %c2_i32_6 : i32 to vector<2x128xi32>
    %10 = arith.cmpi sge, %7, %9 : vector<2x128xi32>
    %c0_i32 = arith.constant 0 : i32
    %11 = vector.broadcast %c0_i32 : i32 to vector<2x128xi32>
    %12 = arith.cmpi ne, %0, %11 : vector<2x128xi32>
    %13 = arith.andi %10, %12 : vector<2x128xi1>
    %14 = arith.cmpi ne, %0, %8 : vector<2x128xi32>
    %15 = arith.andi %13, %14 : vector<2x128xi1>
    %c0_7 = arith.constant 0 : index
    %c0_8 = arith.constant 0 : index
    %c0_9 = arith.constant 0 : index
    %16 = vector.load %arg3[%c0_7, %c0_8, %c0_9] : memref<16x2x32xf32, #tpu.memory_space<vmem>>, vector<16x2x32xf32>
    %cst = arith.constant dense<0xFF800000> : vector<16x2xf32>
    %17 = vector.multi_reduction <maximumf>, %16, %cst [2] : vector<16x2x32xf32> to vector<16x2xf32>
    %18 = vector.shape_cast %17 : vector<16x2xf32> to vector<16x2x1xf32>
    %19 = vector.broadcast %18 : vector<16x2x1xf32> to vector<16x2x32xf32>
    %20 = arith.subf %16, %19 : vector<16x2x32xf32>
    %21 = math.exp %20 : vector<16x2x32xf32>
    %cst_10 = arith.constant dense<0.000000e+00> : vector<16x2xf32>
    %22 = vector.multi_reduction <add>, %21, %cst_10 [2] : vector<16x2x32xf32> to vector<16x2xf32>
    %23 = vector.shape_cast %22 : vector<16x2xf32> to vector<16x2x1xf32>
    %24 = math.log %23 : vector<16x2x1xf32>
    %25 = vector.broadcast %24 : vector<16x2x1xf32> to vector<16x2x32xf32>
    %26 = arith.subf %20, %25 : vector<16x2x32xf32>
    %27 = tpu.iota {dimensions = array<i32: 0>} : vector<32x128xi32>
    %28 = vector.extract_strided_slice %0 {offsets = [0, 0], sizes = [1, 128], strides = [1, 1]} : vector<2x128xi32> to vector<1x128xi32>
    %29 = vector.broadcast %28 : vector<1x128xi32> to vector<32x128xi32>
    %30 = arith.cmpi eq, %27, %29 : vector<32x128xi32>
    %31 = arith.extui %30 : vector<32x128xi1> to vector<32x128xi32>
    %32 = arith.sitofp %31 : vector<32x128xi32> to vector<32x128xf32>
    %33 = vector.extract_strided_slice %26 {offsets = [0, 0, 0], sizes = [16, 1, 32], strides = [1, 1, 1]} : vector<16x2x32xf32> to vector<16x1x32xf32>
    %34 = vector.shape_cast %33 : vector<16x1x32xf32> to vector<16x32xf32>
    %cst_11 = arith.constant dense<0.000000e+00> : vector<16x128xf32>
    %35 = tpu.matmul %34, %32, %cst_11 {dimension_numbers = #tpu.dot_dimension_numbers<[1], [0], [0], [1], [0, 0, 1, 1], [], []>} : vector<16x32xf32>, vector<32x128xf32>, vector<16x128xf32> -> vector<16x128xf32>
    %c0_12 = arith.constant 0 : index
    %c0_13 = arith.constant 0 : index
    %c0_14 = arith.constant 0 : index
    %36 = vector.load %arg8[%c0_12, %c0_13, %c0_14] : memref<16x2x128xf32, #tpu.memory_space<vmem>>, vector<16x1x128xf32>
    %37 = vector.shape_cast %36 : vector<16x1x128xf32> to vector<16x128xf32>
    %38 = vector.shape_cast %35 : vector<16x128xf32> to vector<16x1x128xf32>
    tpu.vector_store %arg8[%c0_12, %c0_13, %c0_14], %38 {strides = array<i32>} : memref<16x2x128xf32, #tpu.memory_space<vmem>>, vector<16x1x128xf32>,
    %39 = vector.extract_strided_slice %0 {offsets = [1, 0], sizes = [1, 128], strides = [1, 1]} : vector<2x128xi32> to vector<1x128xi32>
    %40 = vector.broadcast %39 : vector<1x128xi32> to vector<32x128xi32>
    %41 = arith.cmpi eq, %27, %40 : vector<32x128xi32>
    %42 = arith.extui %41 : vector<32x128xi1> to vector<32x128xi32>
    %43 = arith.sitofp %42 : vector<32x128xi32> to vector<32x128xf32>
    %44 = vector.extract_strided_slice %26 {offsets = [0, 1, 0], sizes = [16, 1, 32], strides = [1, 1, 1]} : vector<16x2x32xf32> to vector<16x1x32xf32>
    %45 = vector.shape_cast %44 : vector<16x1x32xf32> to vector<16x32xf32>
    %cst_15 = arith.constant dense<0.000000e+00> : vector<16x128xf32>
    %46 = tpu.matmul %45, %43, %cst_15 {dimension_numbers = #tpu.dot_dimension_numbers<[1], [0], [0], [1], [0, 0, 1, 1], [], []>} : vector<16x32xf32>, vector<32x128xf32>, vector<16x128xf32> -> vector<16x128xf32>
    %c0_16 = arith.constant 0 : index
    %c1 = arith.constant 1 : index
    %c0_17 = arith.constant 0 : index
    %47 = vector.load %arg8[%c0_16, %c1, %c0_17] : memref<16x2x128xf32, #tpu.memory_space<vmem>>, vector<16x1x128xf32>
    %48 = vector.shape_cast %47 : vector<16x1x128xf32> to vector<16x128xf32>
    %49 = vector.shape_cast %46 : vector<16x128xf32> to vector<16x1x128xf32>
    tpu.vector_store %arg8[%c0_16, %c1, %c0_17], %49 {strides = array<i32>} : memref<16x2x128xf32, #tpu.memory_space<vmem>>, vector<16x1x128xf32>,
    %c16_i32 = arith.constant 16 : i32
    %50 = arith.muli %arg1, %c16_i32 : i32
    %c0_i32_18 = arith.constant 0 : i32
    %51 = arith.cmpi eq, %arg1, %c0_i32_18 : i32
    %52 = arith.extui %51 : i1 to i32
    %c0_i32_19 = arith.constant 0 : i32
    %53 = arith.cmpi ne, %52, %c0_i32_19 : i32
    scf.if %53 {
      %c0_32 = arith.constant 0 : index
      %c0_33 = arith.constant 0 : index
      %c0_34 = arith.constant 0 : index
      %69 = vector.load %arg8[%c0_32, %c0_33, %c0_34] : memref<16x2x128xf32, #tpu.memory_space<vmem>>, vector<1x2x128xf32>
      %70 = vector.shape_cast %69 : vector<1x2x128xf32> to vector<2x128xf32>
      %c2_i32_35 = arith.constant 2 : i32
      %71 = vector.broadcast %c2_i32_35 : i32 to vector<2x1xi32>
      %72 = arith.minsi %6, %71 : vector<2x1xi32>
      %73 = vector.broadcast %72 : vector<2x1xi32> to vector<2x128xi32>
      %74 = arith.cmpi slt, %7, %73 : vector<2x128xi32>
      %cst_36 = arith.constant -1.000000e+30 : f32
      %75 = vector.broadcast %cst_36 : f32 to vector<2x128xf32>
      %76 = arith.select %74, %70, %75 : vector<2x128xi1>, vector<2x128xf32>
      %c0_37 = arith.constant 0 : index
      %c0_38 = arith.constant 0 : index
      %77 = vector.load %arg9[%c0_37, %c0_38] : memref<2x128xf32, #tpu.memory_space<vmem>>, vector<2x128xf32>
      tpu.vector_store %arg9[%c0_37, %c0_38], %76 {strides = array<i32>} : memref<2x128xf32, #tpu.memory_space<vmem>>, vector<2x128xf32>,
    } else {
    }
    %54 = arith.index_cast %arg0 : i32 to index
    %55 = memref.load %arg2[%54] : memref<1xi32, #tpu.memory_space<smem>>
    %c0_i32_20 = arith.constant 0 : i32
    %56 = arith.cmpi eq, %arg1, %c0_i32_20 : i32
    %c1_i32_21 = arith.constant 1 : i32
    %c0_i32_22 = arith.constant 0 : i32
    %57 = arith.select %56, %c1_i32_21, %c0_i32_22 : i32
    %58 = arith.subi %55, %50 : i32
    %c0_i32_23 = arith.constant 0 : i32
    %c16_i32_24 = arith.constant 16 : i32
    %59 = arith.maxsi %c0_i32_23, %58 : i32
    %60 = arith.minsi %c16_i32_24, %59 : i32
    %c0_25 = arith.constant 0 : index
    %c0_26 = arith.constant 0 : index
    %61 = vector.load %arg9[%c0_25, %c0_26] : memref<2x128xf32, #tpu.memory_space<vmem>>, vector<2x128xf32>
    %62 = arith.subi %60, %57 : i32
    %63 = arith.addi %57, %62 : i32
    %c1_i32_27 = arith.constant 1 : i32
    %64 = scf.for %arg10 = %57 to %63 step %c1_i32_27 iter_args(%arg11 = %61) -> (vector<2x128xf32>)  : i32 {
      %c1_i32_32 = arith.constant 1 : i32
      %69 = vector.broadcast %c1_i32_32 : i32 to vector<2x128xi32>
      %70 = arith.cmpi sge, %7, %69 : vector<2x128xi32>
      %c1_i32_33 = arith.constant 1 : i32
      %71 = tpu.dynamic_rotate %arg11 by %c1_i32_33 dim 1 : vector<2x128xf32>, i32 -> vector<2x128xf32>
      %cst_34 = arith.constant -1.000000e+30 : f32
      %72 = vector.broadcast %cst_34 : f32 to vector<2x128xf32>
      %73 = arith.select %70, %71, %72 : vector<2x128xi1>, vector<2x128xf32>
      %c2_i32_35 = arith.constant 2 : i32
      %74 = tpu.dynamic_rotate %arg11 by %c2_i32_35 dim 1 : vector<2x128xf32>, i32 -> vector<2x128xf32>
      %cst_36 = arith.constant -1.000000e+30 : f32
      %75 = vector.broadcast %cst_36 : f32 to vector<2x128xf32>
      %76 = arith.select %15, %74, %75 : vector<2x128xi1>, vector<2x128xf32>
      %77 = arith.maximumf %arg11, %73 : vector<2x128xf32>
      %78 = arith.maximumf %77, %76 : vector<2x128xf32>
      %79 = arith.subf %arg11, %78 : vector<2x128xf32>
      %80 = math.exp %79 : vector<2x128xf32>
      %81 = arith.subf %73, %78 : vector<2x128xf32>
      %82 = math.exp %81 : vector<2x128xf32>
      %83 = arith.addf %80, %82 : vector<2x128xf32>
      %84 = arith.subf %76, %78 : vector<2x128xf32>
      %85 = math.exp %84 : vector<2x128xf32>
      %86 = arith.addf %83, %85 : vector<2x128xf32>
      %87 = math.log %86 : vector<2x128xf32>
      %88 = arith.addf %78, %87 : vector<2x128xf32>
      %89 = arith.index_cast %arg10 : i32 to index
      %c0_37 = arith.constant 0 : index
      %c0_38 = arith.constant 0 : index
      %90 = vector.load %arg8[%89, %c0_37, %c0_38] : memref<16x2x128xf32, #tpu.memory_space<vmem>>, vector<1x2x128xf32>
      %91 = vector.shape_cast %90 : vector<1x2x128xf32> to vector<2x128xf32>
      %92 = vector.broadcast %6 : vector<2x1xi32> to vector<2x128xi32>
      %93 = arith.cmpi slt, %7, %92 : vector<2x128xi32>
      %94 = arith.addf %88, %91 : vector<2x128xf32>
      %cst_39 = arith.constant -1.000000e+30 : f32
      %95 = vector.broadcast %cst_39 : f32 to vector<2x128xf32>
      %96 = arith.select %93, %94, %95 : vector<2x128xi1>, vector<2x128xf32>
      %97 = arith.addi %50, %arg10 : i32
      %98 = vector.broadcast %97 : i32 to vector<2x1xi32>
      %99 = arith.cmpi slt, %98, %1 : vector<2x1xi32>
      %100 = vector.shape_cast %99 : vector<2x1xi1> to vector<2x1xi1>
      %101 = vector.broadcast %100 : vector<2x1xi1> to vector<2x128xi1>
      %102 = arith.select %101, %96, %arg11 : vector<2x128xi1>, vector<2x128xf32>
      scf.yield %102 : vector<2x128xf32>
    }
    %c0_28 = arith.constant 0 : index
    %c0_29 = arith.constant 0 : index
    %65 = vector.load %arg9[%c0_28, %c0_29] : memref<2x128xf32, #tpu.memory_space<vmem>>, vector<2x128xf32>
    tpu.vector_store %arg9[%c0_28, %c0_29], %64 {strides = array<i32>} : memref<2x128xf32, #tpu.memory_space<vmem>>, vector<2x128xf32>,
    %c0_i32_30 = arith.constant 0 : i32
    %66 = arith.cmpi eq, %arg1, %c0_i32_30 : i32
    %67 = arith.extui %66 : i1 to i32
    %c0_i32_31 = arith.constant 0 : i32
    %68 = arith.cmpi ne, %67, %c0_i32_31 : i32
    scf.if %68 {
      %c0_32 = arith.constant 0 : index
      %c0_33 = arith.constant 0 : index
      %69 = vector.load %arg9[%c0_32, %c0_33] : memref<2x128xf32, #tpu.memory_space<vmem>>, vector<2x128xf32>
      %c1_i32_34 = arith.constant 1 : i32
      %70 = vector.broadcast %c1_i32_34 : i32 to vector<2x1xi32>
      %71 = arith.subi %6, %70 : vector<2x1xi32>
      %72 = vector.broadcast %71 : vector<2x1xi32> to vector<2x128xi32>
      %73 = arith.cmpi eq, %7, %72 : vector<2x128xi32>
      %c2_i32_35 = arith.constant 2 : i32
      %74 = vector.broadcast %c2_i32_35 : i32 to vector<2x1xi32>
      %75 = arith.subi %6, %74 : vector<2x1xi32>
      %76 = vector.broadcast %75 : vector<2x1xi32> to vector<2x128xi32>
      %77 = arith.cmpi eq, %7, %76 : vector<2x128xi32>
      %c2_i32_36 = arith.constant 2 : i32
      %78 = vector.broadcast %c2_i32_36 : i32 to vector<2x1xi32>
      %79 = arith.cmpi sge, %6, %78 : vector<2x1xi32>
      %80 = vector.broadcast %79 : vector<2x1xi1> to vector<2x128xi1>
      %81 = arith.andi %77, %80 : vector<2x128xi1>
      %82 = arith.ori %73, %81 : vector<2x128xi1>
      %cst_37 = arith.constant -1.000000e+30 : f32
      %83 = vector.broadcast %cst_37 : f32 to vector<2x128xf32>
      %84 = arith.select %82, %69, %83 : vector<2x128xi1>, vector<2x128xf32>
      %cst_38 = arith.constant dense<0xFF800000> : vector<2xf32>
      %85 = vector.multi_reduction <maximumf>, %84, %cst_38 [1] : vector<2x128xf32> to vector<2xf32>
      %86 = vector.shape_cast %85 : vector<2xf32> to vector<2x1xf32>
      %87 = vector.broadcast %86 : vector<2x1xf32> to vector<2x128xf32>
      %88 = arith.subf %84, %87 : vector<2x128xf32>
      %89 = math.exp %88 : vector<2x128xf32>
      %cst_39 = arith.constant dense<0.000000e+00> : vector<2xf32>
      %90 = vector.multi_reduction <add>, %89, %cst_39 [1] : vector<2x128xf32> to vector<2xf32>
      %91 = vector.shape_cast %90 : vector<2xf32> to vector<2x1xf32>
      %92 = math.log %91 : vector<2x1xf32>
      %93 = arith.addf %86, %92 : vector<2x1xf32>
      %cst_40 = arith.constant 0.000000e+00 : f32
      %94 = vector.broadcast %cst_40 : f32 to vector<2x1xf32>
      %95 = arith.subf %94, %93 : vector<2x1xf32>
      %cst_41 = arith.constant 5.000000e+29 : f32
      %96 = vector.broadcast %cst_41 : f32 to vector<2x1xf32>
      %97 = arith.cmpf ogt, %95, %96 : vector<2x1xf32>
      %cst_42 = arith.constant 0.000000e+00 : f32
      %98 = vector.broadcast %cst_42 : f32 to vector<2x1xf32>
      %99 = arith.select %97, %98, %95 : vector<2x1xi1>, vector<2x1xf32>
      %c1_i32_43 = arith.constant 1 : i32
      %100 = vector.broadcast %c1_i32_43 : i32 to vector<2x1xi32>
      %101 = arith.maxsi %2, %100 : vector<2x1xi32>
      %102 = arith.sitofp %101 : vector<2x1xi32> to vector<2x1xf32>
      %103 = arith.divf %99, %102 : vector<2x1xf32>
      %104 = vector.shape_cast %103 : vector<2x1xf32> to vector<1x2x1xf32>
      %105 = vector.shape_cast %104 : vector<1x2x1xf32> to vector<1x2x1xf32>
      %106 = vector.broadcast %105 : vector<1x2x1xf32> to vector<1x2x128xf32>
      %c0_44 = arith.constant 0 : index
      %c0_45 = arith.constant 0 : index
      %c0_46 = arith.constant 0 : index
      %107 = vector.load %arg7[%c0_44, %c0_45, %c0_46] : memref<1x2x128xf32, #tpu.memory_space<vmem>>, vector<1x2x128xf32>
      tpu.vector_store %arg7[%c0_44, %c0_45, %c0_46], %106 {strides = array<i32>} : memref<1x2x128xf32, #tpu.memory_space<vmem>>, vector<1x2x128xf32>,
    } else {
    }
    return
  }
  func.func @transform_0(%arg0: i32, %arg1: i32, %arg2: memref<1xi32, #tpu.memory_space<smem>>) -> (i32, i32, i32) {
    %c0_i32 = arith.constant 0 : i32
    %c0_i32_0 = arith.constant 0 : i32
    return %arg1, %arg0, %c0_i32 : i32, i32, i32
  }
  func.func @transform_1(%arg0: i32, %arg1: i32, %arg2: memref<1xi32, #tpu.memory_space<smem>>) -> (i32, i32) {
    %c0_i32 = arith.constant 0 : i32
    %c0_i32_0 = arith.constant 0 : i32
    return %arg0, %c0_i32 : i32, i32
  }
  func.func @transform_2(%arg0: i32, %arg1: i32, %arg2: memref<1xi32, #tpu.memory_space<smem>>) -> (i32, i32) {
    %c0_i32 = arith.constant 0 : i32
    %c0_i32_0 = arith.constant 0 : i32
    return %arg0, %c0_i32 : i32, i32
  }
  func.func @transform_3(%arg0: i32, %arg1: i32, %arg2: memref<1xi32, #tpu.memory_space<smem>>) -> (i32, i32) {
    %c0_i32 = arith.constant 0 : i32
    %c0_i32_0 = arith.constant 0 : i32
    return %arg0, %c0_i32 : i32, i32
  }
  func.func @transform_4(%arg0: i32, %arg1: i32, %arg2: memref<1xi32, #tpu.memory_space<smem>>) -> (i32, i32, i32) {
    %c0_i32 = arith.constant 0 : i32
    %c0_i32_0 = arith.constant 0 : i32
    %c0_i32_1 = arith.constant 0 : i32
    return %arg0, %c0_i32, %c0_i32_0 : i32, i32, i32
  }
}

</mosaic_0001>

<llo_original>
// kernel: tpu_custom_call.1
$region0: #{tpu_custom_call.1}
  #allocation0 [shape = 'u32[]', space=smem, size = 0x4, offset = 0x4, fixed_abs, tag = 'smem constant byte address 0x4 - core index']
  #allocation1 [shape = 'u32[72,128]{1,0:T(1,128)}', space=vmem, size = 0x9000, scoped, tag = 'internal scratch']
  #allocation2 [shape = 'f32[16,2,128]{2,1,0:T(2,128)}', space=vmem, size = 0x4000, scoped, tag = 'scratch operand']
  #allocation3 [shape = 'f32[2,128]{1,0:T(2,128)}', space=vmem, size = 0x400, scoped, tag = 'scratch operand']
  #allocation4 [shape = 's32[1]{0}', space=sflag, size = 0x4, scoped, tag = 'scoped memory for tpu_custom_call.1']
  #allocation5 [shape = 's32[1]{0:T(128)S(6)}', space=smem, size = 0x200, scoped, tag = 'prefetched SMEM operand 0']
  %s0 = inlined_call_operand.<no memory space> [shape: s32[1], index: 0, kind: input, shape index: {}]
  %s1 = inlined_call_operand.hbm [shape: f32[16,2,32], index: 1, kind: input, shape index: {}]
  %s2 = inlined_call_operand.vmem [shape: s32[2,128], index: 2, kind: input, shape index: {}]
  %s3 = inlined_call_operand.vmem [shape: s32[2,1], index: 3, kind: input, shape index: {}]
  %s4 = inlined_call_operand.vmem [shape: s32[2,1], index: 4, kind: input, shape index: {}]
  %s5 = inlined_call_operand.hbm [shape: f32[1,2,128], index: 5, kind: output, shape index: {}]
  %s6 = sld [smem:[#allocation0]]
  $region45: #{tpu_custom_call.1} parent=0
    _
  %s8 = ssub.s32 1, %s6
  %s9 = scalar_select 0, %s8, %s6
  %10 = sst [smem:[#allocation5]] %s0
  $region1: #{tpu_custom_call.1} parent=0
    #allocation6 [shape = 'u8[16384]{0}', space=vmem, size = 0x4000, scoped, tag = 'input window, operand 1, single buffered']
    #allocation7 [shape = 's32[1]{0}', space=sflag, size = 0x4, scoped, tag = 'scoped memory for tpu_custom_call.1']
    #allocation8 [shape = 's32[1]{0}', space=sflag, size = 0x4, scoped, tag = 'scoped memory for tpu_custom_call.1']
    #allocation9 [shape = 'u8[1024]{0}', space=vmem, size = 0x400, scoped, tag = 'output window, operand 0, single buffered']
    %11 = vsyncpa [#allocation7], 0
    %12 = vsyncpa [#allocation8], 0
    // Predicated region
    $region2: #{tpu_custom_call.1} parent=1 // pred_check
      _
    $region3: #{tpu_custom_call.1} parent=1 // pred_check_branch
      %14 = sbr.rel (0) target = $region5
    $region4: #{tpu_custom_call.1} parent=1 // pred_region
      %16 = vsyncadd [#allocation7], 0
      %s17 = sshll.u32 %s1, 4
      %s18 = int_to_ptr.hbm [resolvable:$true] %s17
      %s19 = sshll.u32 [#allocation6], 4
      %s20 = int_to_ptr.vmem [resolvable:$true] %s19
      %25 = dma.hbm_to_vmem [thread:$0]  %s18, 512, %s20, [#allocation7], 32, 32, 2
    $region5: #{tpu_custom_call.1} parent=1 // pred_fallthru
      _
    // Predicated region
    $region6: #{tpu_custom_call.1} parent=1 // pred_check
      _
    $region7: #{tpu_custom_call.1} parent=1 // pred_check_branch
      %27 = sbr.rel (0) target = $region9
    $region8: #{tpu_custom_call.1} parent=1 // pred_region
      _
    $region9: #{tpu_custom_call.1} parent=1 // pred_fallthru
      _
    // Predicated region
    $region10: #{tpu_custom_call.1} parent=1 // pred_check
      _
    $region11: #{tpu_custom_call.1} parent=1 // pred_check_branch
      %29 = sbr.rel (0) target = $region13
    $region12: #{tpu_custom_call.1} parent=1 // pred_region
      _
    $region13: #{tpu_custom_call.1} parent=1 // pred_fallthru
      _
    // Predicated region
    $region14: #{tpu_custom_call.1} parent=1 // pred_check
      _
    $region15: #{tpu_custom_call.1} parent=1 // pred_check_branch
      %31 = sbr.rel (0) target = $region17
    $region16: #{tpu_custom_call.1} parent=1 // pred_region
      _
    $region17: #{tpu_custom_call.1} parent=1 // pred_fallthru
      _
    // Predicated region
    $region18: #{tpu_custom_call.1} parent=1 // pred_check
      _
    $region19: #{tpu_custom_call.1} parent=1 // pred_check_branch
      %33 = sbr.rel (0) target = $region21
    $region20: #{tpu_custom_call.1} parent=1 // pred_region
      %35 = dma.done [#allocation7], 512
    $region21: #{tpu_custom_call.1} parent=1 // pred_fallthru
      _
    %v36 = vld [vmem:[%s2] sm:$0x3]
    %v37 = vld [vmem:[%s3] sm:$0x3]
    %v38 = vld [vmem:[%s4] sm:$0x3]
    %v39 = vmul.u32 %v38, 2
    %v40 = vadd.s32 %v39, 1
    %v41 = vlaneseq
    %v42 = vand.u32 %v41, 127
    %43 = vrot.lane.b32.xlu0 %v36, 2
    %v44 = vpop.permute.xlu0 %43
    %vm45 = vcmp.ge.s32.totalorder %v42, 2
    %vm46 = vcmp.ne.s32.totalorder %v36, 0
    %vm47 = vmand %vm45, %vm46
    %vm48 = vcmp.ne.s32.totalorder %v36, %v44
    %vm49 = vmand %vm47, %vm48
    %v50 = vld [vmem:[#allocation6] sm:$0x3]
    %v51 = vld [vmem:[#allocation6 + $0x2] sm:$0x3]
    %v52 = vld [vmem:[#allocation6 + $0x4] sm:$0x3]
    %v53 = vld [vmem:[#allocation6 + $0x6] sm:$0x3]
    %v54 = vld [vmem:[#allocation6 + $0x8] sm:$0x3]
    %v55 = vld [vmem:[#allocation6 + $0xa] sm:$0x3]
    %v56 = vld [vmem:[#allocation6 + $0xc] sm:$0x3]
    %v57 = vld [vmem:[#allocation6 + $0xe] sm:$0x3]
    %v58 = vld [vmem:[#allocation6 + $0x10] sm:$0x3]
    %v59 = vld [vmem:[#allocation6 + $0x12] sm:$0x3]
    %v60 = vld [vmem:[#allocation6 + $0x14] sm:$0x3]
    %v61 = vld [vmem:[#allocation6 + $0x16] sm:$0x3]
    %v62 = vld [vmem:[#allocation6 + $0x18] sm:$0x3]
    %v63 = vld [vmem:[#allocation6 + $0x1a] sm:$0x3]
    %v64 = vld [vmem:[#allocation6 + $0x1c] sm:$0x3]
    %v65 = vld [vmem:[#allocation6 + $0x1e] sm:$0x3]
    %vm66 = vcmask 254976
    %v67 = vsel %vm66, %v50, -inf
    %68 = vmax.xlane.f32.xlu0 %v67
    %v69 = vpop.xlane.xlu0 %68
    %v70 = vsel %vm66, %v51, -inf
    %71 = vmax.xlane.f32.xlu0 %v70
    %v72 = vpop.xlane.xlu0 %71
    %v73 = vsel %vm66, %v52, -inf
    %74 = vmax.xlane.f32.xlu0 %v73
    %v75 = vpop.xlane.xlu0 %74
    %v76 = vsel %vm66, %v53, -inf
    %77 = vmax.xlane.f32.xlu0 %v76
    %v78 = vpop.xlane.xlu0 %77
    %v79 = vsel %vm66, %v54, -inf
    %80 = vmax.xlane.f32.xlu0 %v79
    %v81 = vpop.xlane.xlu0 %80
    %v82 = vsel %vm66, %v55, -inf
    %83 = vmax.xlane.f32.xlu0 %v82
    %v84 = vpop.xlane.xlu0 %83
    %v85 = vsel %vm66, %v56, -inf
    %86 = vmax.xlane.f32.xlu0 %v85
    %v87 = vpop.xlane.xlu0 %86
    %v88 = vsel %vm66, %v57, -inf
    %89 = vmax.xlane.f32.xlu0 %v88
    %v90 = vpop.xlane.xlu0 %89
    %v91 = vsel %vm66, %v58, -inf
    %92 = vmax.xlane.f32.xlu0 %v91
    %v93 = vpop.xlane.xlu0 %92
    %v94 = vsel %vm66, %v59, -inf
    %95 = vmax.xlane.f32.xlu0 %v94
    %v96 = vpop.xlane.xlu0 %95
    %v97 = vsel %vm66, %v60, -inf
    %98 = vmax.xlane.f32.xlu0 %v97
    %v99 = vpop.xlane.xlu0 %98
    %v100 = vsel %vm66, %v61, -inf
    %101 = vmax.xlane.f32.xlu0 %v100
    %v102 = vpop.xlane.xlu0 %101
    %v103 = vsel %vm66, %v62, -inf
    %104 = vmax.xlane.f32.xlu0 %v103
    %v105 = vpop.xlane.xlu0 %104
    %v106 = vsel %vm66, %v63, -inf
    %107 = vmax.xlane.f32.xlu0 %v106
    %v108 = vpop.xlane.xlu0 %107
    %v109 = vsel %vm66, %v64, -inf
    %110 = vmax.xlane.f32.xlu0 %v109
    %v111 = vpop.xlane.xlu0 %110
    %v112 = vsel %vm66, %v65, -inf
    %113 = vmax.xlane.f32.xlu0 %v112
    %v114 = vpop.xlane.xlu0 %113
    %v115 = vsub.f32 %v50, %v69
    %v116 = vsub.f32 %v51, %v72
    %v117 = vsub.f32 %v52, %v75
    %v118 = vsub.f32 %v53, %v78
    %v119 = vsub.f32 %v54, %v81
    %v120 = vsub.f32 %v55, %v84
    %v121 = vsub.f32 %v56, %v87
    %v122 = vsub.f32 %v57, %v90
    %v123 = vsub.f32 %v58, %v93
    %v124 = vsub.f32 %v59, %v96
    %v125 = vsub.f32 %v60, %v99
    %v126 = vsub.f32 %v61, %v102
    %v127 = vsub.f32 %v62, %v105
    %v128 = vsub.f32 %v63, %v108
    %v129 = vsub.f32 %v64, %v111
    %v130 = vsub.f32 %v65, %v114
    %v131 = vmul.f32 %v115, 1.442695
    %v132 = vpow.pop %v131
    %v133 = vmul.f32 %v116, 1.442695
    %v134 = vpow.pop %v133
    %v135 = vmul.f32 %v117, 1.442695
    %v136 = vpow.pop %v135
    %v137 = vmul.f32 %v118, 1.442695
    %v138 = vpow.pop %v137
    %v139 = vmul.f32 %v119, 1.442695
    %v140 = vpow.pop %v139
    %v141 = vmul.f32 %v120, 1.442695
    %v142 = vpow.pop %v141
    %v143 = vmul.f32 %v121, 1.442695
    %v144 = vpow.pop %v143
    %v145 = vmul.f32 %v122, 1.442695
    %v146 = vpow.pop %v145
    %v147 = vmul.f32 %v123, 1.442695
    %v148 = vpow.pop %v147
    %v149 = vmul.f32 %v124, 1.442695
    %v150 = vpow.pop %v149
    %v151 = vmul.f32 %v125, 1.442695
    %v152 = vpow.pop %v151
    %v153 = vmul.f32 %v126, 1.442695
    %v154 = vpow.pop %v153
    %v155 = vmul.f32 %v127, 1.442695
    %v156 = vpow.pop %v155
    %v157 = vmul.f32 %v128, 1.442695
    %v158 = vpow.pop %v157
    %v159 = vmul.f32 %v129, 1.442695
    %v160 = vpow.pop %v159
    %v161 = vmul.f32 %v130, 1.442695
    %v162 = vpow.pop %v161
    %v163 = vsel %vm66, %v132, 0.0
    %164 = vadd.xlane.f32.xlu0 %v163
    %v165 = vpop.xlane.xlu0 %164
    %v166 = vsel %vm66, %v134, 0.0
    %167 = vadd.xlane.f32.xlu0 %v166
    %v168 = vpop.xlane.xlu0 %167
    %v169 = vsel %vm66, %v136, 0.0
    %170 = vadd.xlane.f32.xlu0 %v169
    %v171 = vpop.xlane.xlu0 %170
    %v172 = vsel %vm66, %v138, 0.0
    %173 = vadd.xlane.f32.xlu0 %v172
    %v174 = vpop.xlane.xlu0 %173
    %v175 = vsel %vm66, %v140, 0.0
    %176 = vadd.xlane.f32.xlu0 %v175
    %v177 = vpop.xlane.xlu0 %176
    %v178 = vsel %vm66, %v142, 0.0
    %179 = vadd.xlane.f32.xlu0 %v178
    %v180 = vpop.xlane.xlu0 %179
    %v181 = vsel %vm66, %v144, 0.0
    %182 = vadd.xlane.f32.xlu0 %v181
    %v183 = vpop.xlane.xlu0 %182
    %v184 = vsel %vm66, %v146, 0.0
    %185 = vadd.xlane.f32.xlu0 %v184
    %v186 = vpop.xlane.xlu0 %185
    %v187 = vsel %vm66, %v148, 0.0
    %188 = vadd.xlane.f32.xlu0 %v187
    %v189 = vpop.xlane.xlu0 %188
    %v190 = vsel %vm66, %v150, 0.0
    %191 = vadd.xlane.f32.xlu0 %v190
    %v192 = vpop.xlane.xlu0 %191
    %v193 = vsel %vm66, %v152, 0.0
    %194 = vadd.xlane.f32.xlu0 %v193
    %v195 = vpop.xlane.xlu0 %194
    %v196 = vsel %vm66, %v154, 0.0
    %197 = vadd.xlane.f32.xlu0 %v196
    %v198 = vpop.xlane.xlu0 %197
    %v199 = vsel %vm66, %v156, 0.0
    %200 = vadd.xlane.f32.xlu0 %v199
    %v201 = vpop.xlane.xlu0 %200
    %v202 = vsel %vm66, %v158, 0.0
    %203 = vadd.xlane.f32.xlu0 %v202
    %v204 = vpop.xlane.xlu0 %203
    %v205 = vsel %vm66, %v160, 0.0
    %206 = vadd.xlane.f32.xlu0 %v205
    %v207 = vpop.xlane.xlu0 %206
    %v208 = vsel %vm66, %v162, 0.0
    %209 = vadd.xlane.f32.xlu0 %v208
    %v210 = vpop.xlane.xlu0 %209
    %v211 = vlog2.pop %v165
    %v212 = vmul.f32 %v211, 0.6931472
    %v213 = vlog2.pop %v168
    %v214 = vmul.f32 %v213, 0.6931472
    %v215 = vlog2.pop %v171
    %v216 = vmul.f32 %v215, 0.6931472
    %v217 = vlog2.pop %v174
    %v218 = vmul.f32 %v217, 0.6931472
    %v219 = vlog2.pop %v177
    %v220 = vmul.f32 %v219, 0.6931472
    %v221 = vlog2.pop %v180
    %v222 = vmul.f32 %v221, 0.6931472
    %v223 = vlog2.pop %v183
    %v224 = vmul.f32 %v223, 0.6931472
    %v225 = vlog2.pop %v186
    %v226 = vmul.f32 %v225, 0.6931472
    %v227 = vlog2.pop %v189
    %v228 = vmul.f32 %v227, 0.6931472
    %v229 = vlog2.pop %v192
    %v230 = vmul.f32 %v229, 0.6931472
    %v231 = vlog2.pop %v195
    %v232 = vmul.f32 %v231, 0.6931472
    %v233 = vlog2.pop %v198
    %v234 = vmul.f32 %v233, 0.6931472
    %v235 = vlog2.pop %v201
    %v236 = vmul.f32 %v235, 0.6931472
    %v237 = vlog2.pop %v204
    %v238 = vmul.f32 %v237, 0.6931472
    %v239 = vlog2.pop %v207
    %v240 = vmul.f32 %v239, 0.6931472
    %v241 = vlog2.pop %v210
    %v242 = vmul.f32 %v241, 0.6931472
    %v243 = vsub.f32 %v115, %v212
    %v244 = vsub.f32 %v116, %v214
    %v245 = vsub.f32 %v117, %v216
    %v246 = vsub.f32 %v118, %v218
    %v247 = vsub.f32 %v119, %v220
    %v248 = vsub.f32 %v120, %v222
    %v249 = vsub.f32 %v121, %v224
    %v250 = vsub.f32 %v122, %v226
    %v251 = vsub.f32 %v123, %v228
    %v252 = vsub.f32 %v124, %v230
    %v253 = vsub.f32 %v125, %v232
    %v254 = vsub.f32 %v126, %v234
    %v255 = vsub.f32 %v127, %v236
    %v256 = vsub.f32 %v128, %v238
    %v257 = vsub.f32 %v129, %v240
    %v258 = vsub.f32 %v130, %v242
    %v259 = vlaneseq
    %v260 = vshrl.u32 %v259, 7
    %v261 = vadd.s32 %v260, 8
    %v262 = vadd.s32 %v260, 16
    %v263 = vadd.s32 %v260, 24
    %v264 = vperm.slane %v36, 0
    %vm265 = vcmp.eq.s32.totalorder %v260, %v264
    %vm266 = vcmp.eq.s32.totalorder %v261, %v264
    %vm267 = vcmp.eq.s32.totalorder %v262, %v264
    %vm268 = vcmp.eq.s32.totalorder %v263, %v264
    %v269 = vsel %vm265, 1, 0
    %v270 = vsel %vm266, 1, 0
    %v271 = vsel %vm267, 1, 0
    %v272 = vsel %vm268, 1, 0
    %v273 = vcvt.s32.f32 %v269
    %v274 = vcvt.s32.f32 %v270
    %v275 = vcvt.s32.f32 %v271
    %v276 = vcvt.s32.f32 %v272
    %v293 = vrot.slane %v244, 7
    %vm294 = vcmask 1041409
    %v295 = vsel %vm294, %v293, %v243
    %v296 = vrot.slane %v245, 6
    %vm297 = vcmask 1042434
    %v298 = vsel %vm297, %v296, %v295
    %v299 = vrot.slane %v246, 5
    %vm300 = vcmask 1043459
    %v301 = vsel %vm300, %v299, %v298
    %v302 = vrot.slane %v247, 4
    %vm303 = vcmask 1044484
    %v304 = vsel %vm303, %v302, %v301
    %v305 = vrot.slane %v248, 3
    %vm306 = vcmask 1045509
    %v307 = vsel %vm306, %v305, %v304
    %v308 = vrot.slane %v249, 2
    %vm309 = vcmask 1046534
    %v310 = vsel %vm309, %v308, %v307
    %v311 = vrot.slane %v250, 1
    %vm312 = vcmask 1047559
    %v313 = vsel %vm312, %v311, %v310
    %v314 = vrot.slane %v252, 7
    %v315 = vsel %vm294, %v314, %v251
    %v316 = vrot.slane %v253, 6
    %v317 = vsel %vm297, %v316, %v315
    %v318 = vrot.slane %v254, 5
    %v319 = vsel %vm300, %v318, %v317
    %v320 = vrot.slane %v255, 4
    %v321 = vsel %vm303, %v320, %v319
    %v322 = vrot.slane %v256, 3
    %v323 = vsel %vm306, %v322, %v321
    %v324 = vrot.slane %v257, 2
    %v325 = vsel %vm309, %v324, %v323
    %v326 = vrot.slane %v258, 1
    %v327 = vsel %vm312, %v326, %v325
    %vm328 = vcmask 261120
    %v329 = vsel %vm328, %v313, 0
    %v331 = vsel %vm328, %v327, 0
    %333 = vmatpush.msra.mxu0 0.0
    %334 = vmatpush.msra.mxu0 0.0
    %335 = vmatpush.msra.mxu0 0.0
    %336 = vmatpush.msra.mxu0 0.0
    %337 = vmatpush.msra.mxu0 0.0
    %338 = vmatpush.msra.mxu0 0.0
    %339 = vmatpush.msra.mxu0 0.0
    %340 = vmatpush.msra.mxu0 0.0
    %341 = vmatpush.msra.mxu0 0.0
    %342 = vmatpush.msra.mxu0 0.0
    %343 = vmatpush.msra.mxu0 0.0
    %344 = vmatpush.msra.mxu0 0.0
    %345 = vmatpush.msra.mxu0 %v276
    %346 = vmatpush.msra.mxu0 %v275
    %347 = vmatpush.msra.mxu0 %v274
    %348 = vmatpush.msra.mxu0 %v273
    %349 = vmatmul.f32.gmra.mxu0 %v329
    %v350 = vpop.f32.mrf.mxu0
    %v351 = vadd.f32 0.0, %v350
    %352 = vmatmul.f32.gmra.mxu0 %v331
    %v353 = vpop.f32.mrf.mxu0
    %v354 = vadd.f32 0.0, %v353
    %355 = vdwg.mxu0
    %v358 = vrot.slane %v351, 1
    %v359 = vrot.slane %v351, 2
    %v360 = vrot.slane %v351, 3
    %v361 = vrot.slane %v351, 4
    %v362 = vrot.slane %v351, 5
    %v363 = vrot.slane %v351, 6
    %v364 = vrot.slane %v351, 7
    %v365 = vrot.slane %v354, 1
    %v366 = vrot.slane %v354, 2
    %v367 = vrot.slane %v354, 3
    %v368 = vrot.slane %v354, 4
    %v369 = vrot.slane %v354, 5
    %v370 = vrot.slane %v354, 6
    %v371 = vrot.slane %v354, 7
    %386 = vst [vmem:[#allocation2] sm:$0x1] %v351
    %387 = vst [vmem:[#allocation2 + $0x2] sm:$0x1] %v358
    %388 = vst [vmem:[#allocation2 + $0x4] sm:$0x1] %v359
    %389 = vst [vmem:[#allocation2 + $0x6] sm:$0x1] %v360
    %390 = vst [vmem:[#allocation2 + $0x8] sm:$0x1] %v361
    %391 = vst [vmem:[#allocation2 + $0xa] sm:$0x1] %v362
    %392 = vst [vmem:[#allocation2 + $0xc] sm:$0x1] %v363
    %393 = vst [vmem:[#allocation2 + $0xe] sm:$0x1] %v364
    %394 = vst [vmem:[#allocation2 + $0x10] sm:$0x1] %v354
    %395 = vst [vmem:[#allocation2 + $0x12] sm:$0x1] %v365
    %396 = vst [vmem:[#allocation2 + $0x14] sm:$0x1] %v366
    %397 = vst [vmem:[#allocation2 + $0x16] sm:$0x1] %v367
    %398 = vst [vmem:[#allocation2 + $0x18] sm:$0x1] %v368
    %399 = vst [vmem:[#allocation2 + $0x1a] sm:$0x1] %v369
    %400 = vst [vmem:[#allocation2 + $0x1c] sm:$0x1] %v370
    %401 = vst [vmem:[#allocation2 + $0x1e] sm:$0x1] %v371
    %v402 = vperm.slane %v36, 1
    %vm403 = vcmp.eq.s32.totalorder %v260, %v402
    %vm404 = vcmp.eq.s32.totalorder %v261, %v402
    %vm405 = vcmp.eq.s32.totalorder %v262, %v402
    %vm406 = vcmp.eq.s32.totalorder %v263, %v402
    %v407 = vsel %vm403, 1, 0
    %v408 = vsel %vm404, 1, 0
    %v409 = vsel %vm405, 1, 0
    %v410 = vsel %vm406, 1, 0
    %v411 = vcvt.s32.f32 %v407
    %v412 = vcvt.s32.f32 %v408
    %v413 = vcvt.s32.f32 %v409
    %v414 = vcvt.s32.f32 %v410
    %v415 = vrot.slane %v243, 1
    %v416 = vsel %vm294, %v244, %v415
    %v417 = vrot.slane %v245, 7
    %v418 = vsel %vm297, %v417, %v416
    %v419 = vrot.slane %v246, 6
    %v420 = vsel %vm300, %v419, %v418
    %v421 = vrot.slane %v247, 5
    %v422 = vsel %vm303, %v421, %v420
    %v423 = vrot.slane %v248, 4
    %v424 = vsel %vm306, %v423, %v422
    %v425 = vrot.slane %v249, 3
    %v426 = vsel %vm309, %v425, %v424
    %v427 = vrot.slane %v250, 2
    %v428 = vsel %vm312, %v427, %v426
    %v429 = vrot.slane %v251, 1
    %v430 = vsel %vm294, %v252, %v429
    %v431 = vrot.slane %v253, 7
    %v432 = vsel %vm297, %v431, %v430
    %v433 = vrot.slane %v254, 6
    %v434 = vsel %vm300, %v433, %v432
    %v435 = vrot.slane %v255, 5
    %v436 = vsel %vm303, %v435, %v434
    %v437 = vrot.slane %v256, 4
    %v438 = vsel %vm306, %v437, %v436
    %v439 = vrot.slane %v257, 3
    %v440 = vsel %vm309, %v439, %v438
    %v441 = vrot.slane %v258, 2
    %v442 = vsel %vm312, %v441, %v440
    %v443 = vsel %vm328, %v428, 0
    %v445 = vsel %vm328, %v442, 0
    %447 = vmatpush.msra.mxu0 0.0
    %448 = vmatpush.msra.mxu0 0.0
    %449 = vmatpush.msra.mxu0 0.0
    %450 = vmatpush.msra.mxu0 0.0
    %451 = vmatpush.msra.mxu0 0.0
    %452 = vmatpush.msra.mxu0 0.0
    %453 = vmatpush.msra.mxu0 0.0
    %454 = vmatpush.msra.mxu0 0.0
    %455 = vmatpush.msra.mxu0 0.0
    %456 = vmatpush.msra.mxu0 0.0
    %457 = vmatpush.msra.mxu0 0.0
    %458 = vmatpush.msra.mxu0 0.0
    %459 = vmatpush.msra.mxu0 %v414
    %460 = vmatpush.msra.mxu0 %v413
    %461 = vmatpush.msra.mxu0 %v412
    %462 = vmatpush.msra.mxu0 %v411
    %463 = vmatmul.f32.gmra.mxu0 %v443
    %v464 = vpop.f32.mrf.mxu0
    %v465 = vadd.f32 0.0, %v464
    %466 = vmatmul.f32.gmra.mxu0 %v445
    %v467 = vpop.f32.mrf.mxu0
    %v468 = vadd.f32 0.0, %v467
    %469 = vdwg.mxu0
    %v472 = vrot.slane %v465, 1
    %v473 = vrot.slane %v465, 2
    %v474 = vrot.slane %v465, 3
    %v475 = vrot.slane %v465, 4
    %v476 = vrot.slane %v465, 5
    %v477 = vrot.slane %v465, 6
    %v478 = vrot.slane %v465, 7
    %v479 = vrot.slane %v468, 1
    %v480 = vrot.slane %v468, 2
    %v481 = vrot.slane %v468, 3
    %v482 = vrot.slane %v468, 4
    %v483 = vrot.slane %v468, 5
    %v484 = vrot.slane %v468, 6
    %v485 = vrot.slane %v468, 7
    %500 = vst [vmem:[#allocation2 + $0x1] sm:$0x1] %v465
    %501 = vst [vmem:[#allocation2 + $0x3] sm:$0x1] %v472
    %502 = vst [vmem:[#allocation2 + $0x5] sm:$0x1] %v473
    %503 = vst [vmem:[#allocation2 + $0x7] sm:$0x1] %v474
    %504 = vst [vmem:[#allocation2 + $0x9] sm:$0x1] %v475
    %505 = vst [vmem:[#allocation2 + $0xb] sm:$0x1] %v476
    %506 = vst [vmem:[#allocation2 + $0xd] sm:$0x1] %v477
    %507 = vst [vmem:[#allocation2 + $0xf] sm:$0x1] %v478
    %508 = vst [vmem:[#allocation2 + $0x11] sm:$0x1] %v468
    %509 = vst [vmem:[#allocation2 + $0x13] sm:$0x1] %v479
    %510 = vst [vmem:[#allocation2 + $0x15] sm:$0x1] %v480
    %511 = vst [vmem:[#allocation2 + $0x17] sm:$0x1] %v481
    %512 = vst [vmem:[#allocation2 + $0x19] sm:$0x1] %v482
    %513 = vst [vmem:[#allocation2 + $0x1b] sm:$0x1] %v483
    %514 = vst [vmem:[#allocation2 + $0x1d] sm:$0x1] %v484
    %515 = vst [vmem:[#allocation2 + $0x1f] sm:$0x1] %v485
    %s516 = smul.u32 0, 16
    %p517 = scmp.eq.s32.totalorder 0, 0
    // Predicated region
    $region22: #{tpu_custom_call.1} parent=1 // pred_check
      %p518 = pneg %p517
    $region23: #{tpu_custom_call.1} parent=1 // pred_check_branch
      %520 = sbr.rel (%p518) target = $region25
    $region24: #{tpu_custom_call.1} parent=1 // pred_region
      %v521 = vld [vmem:[#allocation2] sm:$0x3]
      %vm522 = vcmp.lt.s32.totalorder %v40, 2
      %v523 = vsel %vm522, %v40, 2
      %524 = vset.pattern.permute.xlu0 0
      %525 = vperm.xlu0 %524, %v523
      %v526 = vpop.permute.xlu0 %525
      %vm527 = vcmp.lt.s32.totalorder %v42, %v526
      %v528 = vsel %vm527, %v521, -1e+30
      %529 = vst [vmem:[#allocation3] sm:$0x3] %v528
    $region25: #{tpu_custom_call.1} parent=1 // pred_fallthru
      _
    %s530 = sld [smem:[#allocation5]]
    %s531 = scalar_select %p517, 1, 0
    %s532 = ssub.s32 %s530, %s516
    %p533 = scmp.gt.s32.totalorder %s532, 0
    %s534 = scalar_select %p533, %s532, 0
    %p535 = scmp.lt.s32.totalorder %s534, 16
    %s536 = scalar_select %p535, %s534, 16
    %v537 = vld [vmem:[#allocation3] sm:$0x3]
    // While loop
    $region26: #{tpu_custom_call.1} parent=1 // loop_pre_header
      _
    $region27: #{tpu_custom_call.1} parent=1 // loop_header
      %s539 = sphi %s531, %s541
      %p540 = scmp.ge.s32.totalorder %s539, %s536
      %v544 = vphi %v537, %v585
    $region28: #{tpu_custom_call.1} parent=1 // loop_header_branch
      %543 = sbr.rel (%p540) target = $region32
    $region29: #{tpu_custom_call.1} parent=1 // loop_body
      %vm545 = vcmp.ge.s32.totalorder %v42, 1
      %546 = vrot.lane.b32.xlu0 %v544, 1
      %v547 = vpop.permute.xlu0 %546
      %v548 = vsel %vm545, %v547, -1e+30
      %549 = vrot.lane.b32.xlu0 %v544, 2
      %v550 = vpop.permute.xlu0 %549
      %v551 = vsel %vm49, %v550, -1e+30
      %v552 = vmax.f32 %v544, %v548
      %v553 = vmax.f32 %v552, %v551
      %v554 = vsub.f32 %v544, %v553
      %v555 = vmul.f32 %v554, 1.442695
      %v556 = vpow.pop %v555
      %v557 = vsub.f32 %v548, %v553
      %v558 = vmul.f32 %v557, 1.442695
      %v559 = vpow.pop %v558
      %v560 = vadd.f32 %v556, %v559
      %v561 = vsub.f32 %v551, %v553
      %v562 = vmul.f32 %v561, 1.442695
      %v563 = vpow.pop %v562
      %v564 = vadd.f32 %v560, %v563
      %v565 = vlog2.pop %v564
      %v566 = vmul.f32 %v565, 0.6931472
      %v567 = vadd.f32 %v553, %v566
      %s568 = smul.u32 %s539, 2
      %s569 = scalar_lea.vmem [#allocation2], %s568
      %v570 = vld [vmem:[%s569] sm:$0x3]
      %571 = vset.pattern.permute.xlu0 0
      %572 = vperm.xlu0 %571, %v40
      %v573 = vpop.permute.xlu0 %572
      %vm574 = vcmp.lt.s32.totalorder %v42, %v573
      %v575 = vadd.f32 %v567, %v570
      %v576 = vsel %vm574, %v575, -1e+30
      %s577 = sadd.s32 %s516, %s539
      %v578 = vstv %s577
      %vm579 = vcmp.lt.s32.totalorder %v578, %v37
      %v580 = vsel %vm579, 1, 0
      %581 = vset.pattern.permute.xlu0 0
      %582 = vperm.xlu0 %581, %v580
      %v583 = vpop.permute.xlu0 %582
      %vm584 = vcmp.eq.s32.totalorder %v583, 1
      %v585 = vsel %vm584, %v576, %v544
    $region30: #{tpu_custom_call.1} parent=1 // loop_footer
      %s541 = sadd.s32 %s539, 1
    $region31: #{tpu_custom_call.1} parent=1 // loop_footer_branch
      %538 = sbr.rel target = $region27
    $region32: #{tpu_custom_call.1} parent=1 // loop_exit
      _
    %586 = vst [vmem:[#allocation3] sm:$0x3] %v544
    // Predicated region
    $region33: #{tpu_custom_call.1} parent=1 // pred_check
      %p587 = pneg %p517
    $region34: #{tpu_custom_call.1} parent=1 // pred_check_branch
      %589 = sbr.rel (%p587) target = $region36
    $region35: #{tpu_custom_call.1} parent=1 // pred_region
      %v590 = vld [vmem:[#allocation3] sm:$0x3]
      %591 = vset.pattern.permute.xlu0 0
      %592 = vperm.xlu0 %591, %v39
      %v593 = vpop.permute.xlu0 %592
      %vm594 = vcmp.eq.s32.totalorder %v42, %v593
      %v595 = vsub.s32 %v40, 2
      %596 = vset.pattern.permute.xlu0 0
      %597 = vperm.xlu0 %596, %v595
      %v598 = vpop.permute.xlu0 %597
      %vm599 = vcmp.eq.s32.totalorder %v42, %v598
      %vm600 = vcmp.ge.s32.totalorder %v40, 2
      %v601 = vsel %vm600, 1, 0
      %602 = vset.pattern.permute.xlu0 0
      %603 = vperm.xlu0 %602, %v601
      %v604 = vpop.permute.xlu0 %603
      %vm605 = vcmp.eq.s32.totalorder %v604, 1
      %vm606 = vmand %vm599, %vm605
      %vm607 = vmor %vm594, %vm606
      %v608 = vsel %vm607, %v590, -1e+30
      %vm609 = vcmask 1041408
      %v610 = vsel %vm609, %v608, -inf
      %611 = vmax.xlane.f32.xlu0 %v610
      %v612 = vpop.xlane.xlu0 %611
      %v613 = vsub.f32 %v608, %v612
      %v614 = vmul.f32 %v613, 1.442695
      %v615 = vpow.pop %v614
      %v616 = vsel %vm609, %v615, 0.0
      %617 = vadd.xlane.f32.xlu0 %v616
      %v618 = vpop.xlane.xlu0 %617
      %v619 = vlog2.pop %v618
      %v620 = vmul.f32 %v619, 0.6931472
      %v621 = vadd.f32 %v612, %v620
      %v622 = vsub.f32 0.0, %v621
      %vm623 = vcmp.gt.f32.partialorder %v622, 5e+29
      %v624 = vsel %vm623, 0.0, %v622
      %vm625 = vcmp.gt.s32.totalorder %v38, 1
      %v626 = vsel %vm625, %v38, 1
      %v627 = vcvt.s32.f32 %v626
      %v628 = vrcp.pop %v627
      %v629 = vmul.f32 %v627, %v628
      %v630 = vsub.f32 1.0, %v629
      %v631 = vmul.f32 %v628, %v630
      %v632 = vadd.f32 %v628, %v631
      %vm633 = vweird.f32 %v627
      %vm634 = vweird.f32 %v628
      %vm635 = vmor %vm633, %vm634
      %v636 = vsel %vm635, %v628, %v632
      %v637 = vand.u32 2147483647, %v627
      %vm638 = vcmp.eq.f32.partialorder %v637, 8.507059e+37
      %v639 = vand.u32 %v627, 2147483648
      %v640 = vor.u32 1.1754944e-38, %v639
      %v641 = vsel %vm638, %v640, %v636
      %v642 = vmul.f32 %v624, %v641
      %644 = vset.pattern.permute.xlu0 0
      %645 = vperm.xlu0 %644, %v642
      %v646 = vpop.permute.xlu0 %645
      %648 = vst [vmem:[#allocation9] sm:$0x3] %v646
    $region36: #{tpu_custom_call.1} parent=1 // pred_fallthru
      _
    // Predicated region
    $region37: #{tpu_custom_call.1} parent=1 // pred_check
      _
    $region38: #{tpu_custom_call.1} parent=1 // pred_check_branch
      %650 = sbr.rel (0) target = $region40
    $region39: #{tpu_custom_call.1} parent=1 // pred_region
      %652 = vsyncadd [#allocation8], 0
      %s654 = sshll.u32 [#allocation9], 4
      %s655 = int_to_ptr.vmem [resolvable:$true] %s654
      %s656 = sshll.u32 %s5, 4
      %s657 = int_to_ptr.hbm [resolvable:$true] %s656
      %659 = dma.vmem_to_hbm [thread:$0]  %s655, 32, %s657, [#allocation8]
    $region40: #{tpu_custom_call.1} parent=1 // pred_fallthru
      _
    // Predicated region
    $region41: #{tpu_custom_call.1} parent=1 // pred_check
      _
    $region42: #{tpu_custom_call.1} parent=1 // pred_check_branch
      %661 = sbr.rel (0) target = $region44
    $region43: #{tpu_custom_call.1} parent=1 // pred_region
      %663 = dma.done [#allocation8], 32
    $region44: #{tpu_custom_call.1} parent=1 // pred_fallthru
      _
    %664 = vsyncpa [#allocation7], 1
    %665 = vsyncpa [#allocation8], 1

</llo_original>
